<compile_context>
chip_gen: v7x
topology: tpu7x:2x2x1
jax: 0.10.0
libtpu: 0.0.40
codegen_flags: <defaults>
</compile_context>

<pallas_src>
import functools
import math

import jax
import jax.numpy as jnp
from jax.experimental import pallas as pl
from jax.experimental.pallas import tpu as pltpu

_MAX_LANES = 128  # lane-dense slab width per j tile for the row-max output


def _round_up(x, m):
    return ((x + m - 1) // m) * m


def _select_tiles(B, K, N, vmem_budget=12 * 1024 * 1024):
    """Pick (tm, tn, tk) so the double-buffered VMEM footprint fits everywhere."""
    tm = min(512, _round_up(B, 8))
    tn = min(512, _round_up(N, 128))
    tk = _round_up(K, 128)  # prefer full-K residency: x fetched once per i

    def footprint(tm, tn, tk, n_p):
        return (
            2 * tm * tk * 2        # x tile, bf16, double-buffered
            + 2 * tk * tn * 2      # w tile, bf16, double-buffered
            + 2 * tm * tn * 4      # out tile, f32, double-buffered
            + 2 * tm * _MAX_LANES * 4  # row-max tile, f32, double-buffered
            + 2 * 8 * n_p * 4      # bias (1, N_p) pads to 8 sublanes
        )

    n_p = _round_up(N, tn)
    while tk > 512 and footprint(tm, tn, tk, n_p) > vmem_budget:
        tk = _round_up(tk // 2, 128)
    while tn > 128 and footprint(tm, tn, tk, n_p) > vmem_budget:
        tn = _round_up(tn // 2, 128)
        n_p = _round_up(N, tn)
    while tm > 8 and footprint(tm, tn, tk, n_p) > vmem_budget:
        tm = _round_up(tm // 2, 8)
    return tm, tn, tk


def lp_kernel(x_ref, w_ref, b_ref, out_ref, max_ref, *, tn):
    j = pl.program_id(1)
    k = pl.program_id(2)
    nk = pl.num_programs(2)

    # Initialize the (k-resident) output tile with the bias row. Padded bias
    # columns are -inf, so padded output columns stay -inf through the f32
    # accumulation and never win the row-max.
    @pl.when(k == 0)
    def _():
        off = pl.multiple_of(j * tn, 128)
        bias = b_ref[:, pl.ds(off, tn)]  # (1, tn), f32
        out_ref[...] = jnp.broadcast_to(bias, out_ref.shape)

    # bf16 x bf16 -> f32 accumulate directly into the output block (its block
    # index ignores k, so it is VMEM-resident across the reduction).
    out_ref[...] += jnp.dot(
        x_ref[...], w_ref[...], preferred_element_type=jnp.float32
    )

    # Epilogue on the last K step: per-(i, j) partial row-max, written as a
    # lane-dense (tm, 128) slab (one unmasked vst). The wrapper reduces the
    # tiny (B, nj*128) array.
    @pl.when(k == nk - 1)
    def _():
        tile_max = jnp.max(out_ref[...], axis=1, keepdims=True)  # (tm, 1)
        max_ref[...] = jnp.broadcast_to(tile_max, max_ref.shape)


def lp_forward(x, w, b, *, tm=None, tn=None, tk=None):
    """x: [B, in_dim] f32, w: [in_dim, out_dim] f32, b: [1, out_dim] f32.
    Returns (out [B, out_dim] f32, row_max [B] f32). Matmul runs in bf16 on
    the MXU with f32 accumulation."""
    B, K = x.shape
    K2, N = w.shape
    assert K2 == K

    atm, atn, atk = _select_tiles(B, K, N)
    tm = atm if tm is None else min(tm, _round_up(B, 8))
    tn = atn if tn is None else min(tn, _round_up(N, 128))
    tk = atk if tk is None else min(tk, _round_up(K, 128))

    B_p = _round_up(B, tm)
    K_p = _round_up(K, tk)
    N_p = _round_up(N, tn)
    nj = N_p // tn

    # bf16 matmul operands; bias stays f32. Padded bias columns are -inf
    # (padded W columns are 0, so padded output columns become -inf and are
    # never picked by the row-max; they are sliced away below).
    x_p = jnp.pad(x, ((0, B_p - B), (0, K_p - K))).astype(jnp.bfloat16)
    w_p = jnp.pad(w, ((0, K_p - K), (0, N_p - N))).astype(jnp.bfloat16)
    b_p = jnp.pad(
        b.reshape(1, N).astype(jnp.float32),
        ((0, 0), (0, N_p - N)),
        constant_values=-jnp.inf,
    )

    grid = (B_p // tm, nj, K_p // tk)
    kernel = functools.partial(lp_kernel, tn=tn)

    cost = pl.CostEstimate(
        flops=2 * B_p * K_p * N_p,
        transcendentals=0,
        bytes_accessed=(
            x_p.size * 2                      # x streamed once per row tile
            + w_p.size * 2 * (B_p // tm)      # W re-streamed per row tile
            + b_p.size * 4
            + B_p * N_p * 4                   # out
            + B_p * nj * _MAX_LANES * 4       # row-max slab
        ),
    )

    out_p, max_p = pl.pallas_call(
        kernel,
        out_shape=(
            jax.ShapeDtypeStruct((B_p, N_p), jnp.float32),
            jax.ShapeDtypeStruct((B_p, nj * _MAX_LANES), jnp.float32),
        ),
        grid_spec=pltpu.PrefetchScalarGridSpec(
            num_scalar_prefetch=0,
            grid=grid,
            in_specs=[
                pl.BlockSpec((tm, tk), lambda i, j, k: (i, k)),
                pl.BlockSpec((tk, tn), lambda i, j, k: (k, j)),
                pl.BlockSpec((1, N_p), lambda i, j, k: (0, 0)),  # bias: one DMA
            ],
            out_specs=[
                pl.BlockSpec((tm, tn), lambda i, j, k: (i, j)),
                pl.BlockSpec((tm, _MAX_LANES), lambda i, j, k: (i, j)),
            ],
        ),
        compiler_params=pltpu.CompilerParams(
            # i and j index independent output blocks -> both megacore-
            # parallel (v7x); k is the reduction -> arbitrary.
            dimension_semantics=("parallel", "parallel", "arbitrary"),
            vmem_limit_bytes=32 * 1024 * 1024,
        ),
        cost_estimate=cost,
    )(x_p, w_p, b_p)

    out = out_p[:B, :N]
    row_max = jnp.max(max_p[:B], axis=1)
    return out, row_max


def _run_case(batch, in_dim, out_dim, key, atol=5e-3, rtol=5e-3, **tiles):
    kx, kw, kb = jax.random.split(key, 3)
    bound = 1.0 / math.sqrt(in_dim)
    # PyTorch nn.Linear weight is [out_dim, in_dim]; stored transposed here.
    w = jax.random.uniform(kw, (in_dim, out_dim), jnp.float32, -bound, bound)
    b = jax.random.uniform(kb, (1, out_dim), jnp.float32, -bound, bound)
    x = jax.random.normal(kx, (batch, in_dim), jnp.float32)

    out, row_max = lp_forward(x, w, b, **tiles)
    jax.block_until_ready((out, row_max))

    # Reference with the same bf16 operands / f32 accumulation as the kernel.
    ref_out = (
        jnp.dot(
            x.astype(jnp.bfloat16),
            w.astype(jnp.bfloat16),
            preferred_element_type=jnp.float32,
        )
        + b
    )
    ref_max = jnp.max(ref_out, axis=1)
    assert out.shape == (batch, out_dim)
    assert row_max.shape == (batch,)
    assert jnp.allclose(out, ref_out, atol=atol, rtol=rtol)
    assert jnp.allclose(row_max, ref_max, atol=atol, rtol=rtol)


if __name__ == "__main__":
    key = jax.random.PRNGKey(0)
    k1, k2, k3 = jax.random.split(key, 3)

    # Small shape consistent with LP(in_dim, out_dim) applied to [batch, in_dim].
    _run_case(8, 32, 16, k1)
    # Larger case with non-aligned dims (padding + -inf bias masking).
    _run_case(64, 300, 300, k2)
    # Forced small tiles: exercises multi-tile K accumulation, multi-j
    # partial row-max blocks, and padded last-j tile.
    _run_case(16, 384, 300, k3, tm=8, tn=128, tk=128)

    print("KERNEL_OK")
</pallas_src>

<mosaic_0001>
module attributes {stable_mosaic.version = 11 : i64} {
  func.func @lp_kernel(%arg0: i32, %arg1: i32, %arg2: i32, %arg3: memref<8x128xbf16, #tpu.memory_space<vmem>>, %arg4: memref<128x128xbf16, #tpu.memory_space<vmem>>, %arg5: memref<1x128xf32, #tpu.memory_space<vmem>>, %arg6: memref<8x128xf32, #tpu.memory_space<vmem>>, %arg7: memref<8x128xf32, #tpu.memory_space<vmem>>) attributes {dimension_semantics = [#tpu.dimension_semantics<parallel>, #tpu.dimension_semantics<parallel>, #tpu.dimension_semantics<arbitrary>], iteration_bounds = array<i64: 1, 1, 1>, scalar_prefetch = 0 : i64, scratch_operands = 0 : i64, tpu.core_type = #tpu.core_type<tc>, window_params = [{transform_indices = @transform_0, window_bounds = array<i64: 8, 128>}, {transform_indices = @transform_1, window_bounds = array<i64: 128, 128>}, {pipeline_mode = #tpu.pipeline_mode<synchronous>, transform_indices = @transform_2, window_bounds = array<i64: 1, 128>}, {transform_indices = @transform_3, window_bounds = array<i64: 8, 128>}, {transform_indices = @transform_4, window_bounds = array<i64: 8, 128>}]} {
    %c0_i32 = arith.constant 0 : i32
    %0 = arith.cmpi eq, %arg2, %c0_i32 : i32
    %1 = arith.extui %0 : i1 to i32
    %c0_i32_0 = arith.constant 0 : i32
    %2 = arith.cmpi ne, %1, %c0_i32_0 : i32
    scf.if %2 {
      %c128_i32 = arith.constant 128 : i32
      %12 = arith.muli %arg1, %c128_i32 : i32
      %13 = tpu.assume_multiple %12, 128 : i32
      %c0_10 = arith.constant 0 : index
      %14 = arith.index_cast %13 : i32 to index
      %15 = vector.load %arg5[%c0_10, %14] : memref<1x128xf32, #tpu.memory_space<vmem>>, vector<1x128xf32>
      %16 = vector.shape_cast %15 : vector<1x128xf32> to vector<1x128xf32>
      %17 = vector.broadcast %16 : vector<1x128xf32> to vector<8x128xf32>
      %c0_11 = arith.constant 0 : index
      %c0_12 = arith.constant 0 : index
      %18 = vector.load %arg6[%c0_11, %c0_12] : memref<8x128xf32, #tpu.memory_space<vmem>>, vector<8x128xf32>
      tpu.vector_store %arg6[%c0_11, %c0_12], %17 {strides = array<i32>} : memref<8x128xf32, #tpu.memory_space<vmem>>, vector<8x128xf32>,
    } else {
    }
    %c0 = arith.constant 0 : index
    %c0_1 = arith.constant 0 : index
    %3 = vector.load %arg6[%c0, %c0_1] : memref<8x128xf32, #tpu.memory_space<vmem>>, vector<8x128xf32>
    %c0_2 = arith.constant 0 : index
    %c0_3 = arith.constant 0 : index
    %4 = vector.load %arg3[%c0_2, %c0_3] : memref<8x128xbf16, #tpu.memory_space<vmem>>, vector<8x128xbf16>
    %c0_4 = arith.constant 0 : index
    %c0_5 = arith.constant 0 : index
    %5 = vector.load %arg4[%c0_4, %c0_5] : memref<128x128xbf16, #tpu.memory_space<vmem>>, vector<128x128xbf16>
    %cst = arith.constant dense<0.000000e+00> : vector<8x128xf32>
    %6 = tpu.matmul %4, %5, %cst {dimension_numbers = #tpu.dot_dimension_numbers<[1], [0], [0], [1], [0, 0, 1, 1], [], []>} : vector<8x128xbf16>, vector<128x128xbf16>, vector<8x128xf32> -> vector<8x128xf32>
    %7 = arith.addf %3, %6 : vector<8x128xf32>
    %c0_6 = arith.constant 0 : index
    %c0_7 = arith.constant 0 : index
    %8 = vector.load %arg6[%c0_6, %c0_7] : memref<8x128xf32, #tpu.memory_space<vmem>>, vector<8x128xf32>
    tpu.vector_store %arg6[%c0_6, %c0_7], %7 {strides = array<i32>} : memref<8x128xf32, #tpu.memory_space<vmem>>, vector<8x128xf32>,
    %c0_i32_8 = arith.constant 0 : i32
    %9 = arith.cmpi eq, %arg2, %c0_i32_8 : i32
    %10 = arith.extui %9 : i1 to i32
    %c0_i32_9 = arith.constant 0 : i32
    %11 = arith.cmpi ne, %10, %c0_i32_9 : i32
    scf.if %11 {
      %c0_10 = arith.constant 0 : index
      %c0_11 = arith.constant 0 : index
      %12 = vector.load %arg6[%c0_10, %c0_11] : memref<8x128xf32, #tpu.memory_space<vmem>>, vector<8x128xf32>
      %cst_12 = arith.constant dense<0xFF800000> : vector<8xf32>
      %13 = vector.multi_reduction <maximumf>, %12, %cst_12 [1] : vector<8x128xf32> to vector<8xf32>
      %14 = vector.shape_cast %13 : vector<8xf32> to vector<8x1xf32>
      %15 = vector.shape_cast %14 : vector<8x1xf32> to vector<8x1xf32>
      %16 = vector.broadcast %15 : vector<8x1xf32> to vector<8x128xf32>
      %c0_13 = arith.constant 0 : index
      %c0_14 = arith.constant 0 : index
      %17 = vector.load %arg7[%c0_13, %c0_14] : memref<8x128xf32, #tpu.memory_space<vmem>>, vector<8x128xf32>
      tpu.vector_store %arg7[%c0_13, %c0_14], %16 {strides = array<i32>} : memref<8x128xf32, #tpu.memory_space<vmem>>, vector<8x128xf32>,
    } else {
    }
    return
  }
  func.func @transform_0(%arg0: i32, %arg1: i32, %arg2: i32) -> (i32, i32) {
    %c0_i32 = arith.constant 0 : i32
    return %arg0, %arg2 : i32, i32
  }
  func.func @transform_1(%arg0: i32, %arg1: i32, %arg2: i32) -> (i32, i32) {
    %c0_i32 = arith.constant 0 : i32
    return %arg2, %arg1 : i32, i32
  }
  func.func @transform_2(%arg0: i32, %arg1: i32, %arg2: i32) -> (i32, i32) {
    %c0_i32 = arith.constant 0 : i32
    %c0_i32_0 = arith.constant 0 : i32
    %c0_i32_1 = arith.constant 0 : i32
    return %c0_i32, %c0_i32_0 : i32, i32
  }
  func.func @transform_3(%arg0: i32, %arg1: i32, %arg2: i32) -> (i32, i32) {
    %c0_i32 = arith.constant 0 : i32
    return %arg0, %arg1 : i32, i32
  }
  func.func @transform_4(%arg0: i32, %arg1: i32, %arg2: i32) -> (i32, i32) {
    %c0_i32 = arith.constant 0 : i32
    return %arg0, %arg1 : i32, i32
  }
}

</mosaic_0001>

<llo_original>
// kernel: tpu_custom_call.1
$region0: #{tpu_custom_call.1}
  #allocation0 [shape = 'u32[]', space=smem, size = 0x4, offset = 0x4, fixed_abs, tag = 'smem constant byte address 0x4 - core index']
  #allocation1 [shape = 'u32[144,128]{1,0:T(1,128)}', space=vmem, size = 0x12000, scoped, tag = 'internal scratch']
  %s0 = inlined_call_operand.hbm [shape: bf16[8,128], index: 0, kind: input, shape index: {}]
  %s1 = inlined_call_operand.hbm [shape: bf16[128,128], index: 1, kind: input, shape index: {}]
  %s2 = inlined_call_operand.vmem [shape: f32[1,128], index: 2, kind: input, shape index: {}]
  %s3 = inlined_call_operand.hbm [shape: f32[8,128], index: 3, kind: output, shape index: {0}]
  %s4 = inlined_call_operand.hbm [shape: f32[8,128], index: 4, kind: output, shape index: {1}]
  %5 = xla_tuple %s3, %s4
  %s6 = sld [smem:[#allocation0]]
  $region46: #{tpu_custom_call.1} parent=0
    _
  %s8 = ssub.s32 1, %s6
  %s9 = scalar_select 0, %s8, %s6
  $region1: #{tpu_custom_call.1} parent=0
    #allocation2 [shape = 'u8[2048]{0}', space=vmem, size = 0x800, scoped, tag = 'input window, operand 0, single buffered']
    #allocation3 [shape = 's32[1]{0}', space=sflag, size = 0x4, scoped, tag = 'scoped memory for tpu_custom_call.1']
    #allocation4 [shape = 's32[1]{0}', space=sflag, size = 0x4, scoped, tag = 'scoped memory for tpu_custom_call.1']
    #allocation5 [shape = 'u8[32768]{0}', space=vmem, size = 0x8000, scoped, tag = 'input window, operand 1, single buffered']
    #allocation6 [shape = 's32[1]{0}', space=sflag, size = 0x4, scoped, tag = 'scoped memory for tpu_custom_call.1']
    #allocation7 [shape = 'u8[4096]{0}', space=vmem, size = 0x1000, scoped, tag = 'output window, operand 0, single buffered']
    #allocation8 [shape = 'u8[4096]{0}', space=vmem, size = 0x1000, scoped, tag = 'output window, operand 1, single buffered']
    #allocation9 [shape = 's32[1]{0}', space=sflag, size = 0x4, scoped, tag = 'scoped memory for tpu_custom_call.1']
    %10 = vsyncpa [#allocation3], 0
    %11 = vsyncpa [#allocation6], 0
    %12 = vsyncpa [#allocation4], 0
    %13 = vsyncpa [#allocation9], 0
    // Predicated region
    $region2: #{tpu_custom_call.1} parent=1 // pred_check
      _
    $region3: #{tpu_custom_call.1} parent=1 // pred_check_branch
      %15 = sbr.rel (0) target = $region5
    $region4: #{tpu_custom_call.1} parent=1 // pred_region
      %s17 = ssub.s32 64, 64
      %18 = vsyncadd [#allocation3], %s17
      %s20 = sshll.u32 [#allocation2], 4
      %s21 = int_to_ptr.vmem [resolvable:$true] %s20
      %23 = dma.hbm_to_vmem [thread:$0]  %s0, 64, %s21, [#allocation3]
    $region5: #{tpu_custom_call.1} parent=1 // pred_fallthru
      _
    // Predicated region
    $region6: #{tpu_custom_call.1} parent=1 // pred_check
      _
    $region7: #{tpu_custom_call.1} parent=1 // pred_check_branch
      %25 = sbr.rel (0) target = $region9
    $region8: #{tpu_custom_call.1} parent=1 // pred_region
      %s27 = ssub.s32 1024, 1024
      %28 = vsyncadd [#allocation6], %s27
      %s29 = sshll.u32 [#allocation5], 4
      %s30 = int_to_ptr.vmem [resolvable:$true] %s29
      %35 = dma.hbm_to_vmem [thread:$0]  %s1, 1024, %s30, [#allocation6], 64, 64, 4
    $region9: #{tpu_custom_call.1} parent=1 // pred_fallthru
      _
    // Predicated region
    $region10: #{tpu_custom_call.1} parent=1 // pred_check
      _
    $region11: #{tpu_custom_call.1} parent=1 // pred_check_branch
      %37 = sbr.rel (0) target = $region13
    $region12: #{tpu_custom_call.1} parent=1 // pred_region
      _
    $region13: #{tpu_custom_call.1} parent=1 // pred_fallthru
      _
    // Predicated region
    $region14: #{tpu_custom_call.1} parent=1 // pred_check
      _
    $region15: #{tpu_custom_call.1} parent=1 // pred_check_branch
      %39 = sbr.rel (0) target = $region17
    $region16: #{tpu_custom_call.1} parent=1 // pred_region
      %40 = dma.done [#allocation3], 64
    $region17: #{tpu_custom_call.1} parent=1 // pred_fallthru
      _
    // Predicated region
    $region18: #{tpu_custom_call.1} parent=1 // pred_check
      _
    $region19: #{tpu_custom_call.1} parent=1 // pred_check_branch
      %42 = sbr.rel (0) target = $region21
    $region20: #{tpu_custom_call.1} parent=1 // pred_region
      %43 = dma.done [#allocation6], 1024
    $region21: #{tpu_custom_call.1} parent=1 // pred_fallthru
      _
    %p45 = scmp.eq.s32.totalorder 0, 0
    // Predicated region
    $region22: #{tpu_custom_call.1} parent=1 // pred_check
      %p46 = pneg %p45
    $region23: #{tpu_custom_call.1} parent=1 // pred_check_branch
      %48 = sbr.rel (%p46) target = $region25
    $region24: #{tpu_custom_call.1} parent=1 // pred_region
      %s49 = smul.u32 0, 128
      %s50 = sshra.s32 %s49, 7
      %s51 = sand.u32 %s49, 127
      %s52 = scalar_lea.vmem %s2, %s50
      %v53 = vld [vmem:[%s52] sm:$0x1]
      %v55 = vlaneseq
      %v56 = vshrl.u32 %v55, 7
      %v57 = vsub.s32 0, %v56
      %v58 = vrot.slane %v53, %v57
      %60 = vst [vmem:[#allocation7] sm:$0xff] %v58
    $region25: #{tpu_custom_call.1} parent=1 // pred_fallthru
      _
    %v61 = vld [vmem:[#allocation7] sm:$0xff]
    %v62 = vld [vmem:[#allocation2] sm:$0xf]
    %v63 = vld [vmem:[#allocation5] sm:$0xf]
    %v64 = vld [vmem:[#allocation5 + $0x4] sm:$0xf]
    %v65 = vld [vmem:[#allocation5 + $0x8] sm:$0xf]
    %v66 = vld [vmem:[#allocation5 + $0xc] sm:$0xf]
    %v67 = vld [vmem:[#allocation5 + $0x10] sm:$0xf]
    %v68 = vld [vmem:[#allocation5 + $0x14] sm:$0xf]
    %v69 = vld [vmem:[#allocation5 + $0x18] sm:$0xf]
    %v70 = vld [vmem:[#allocation5 + $0x1c] sm:$0xf]
    %v71 = vld [vmem:[#allocation5 + $0x20] sm:$0xf]
    %v72 = vld [vmem:[#allocation5 + $0x24] sm:$0xf]
    %v73 = vld [vmem:[#allocation5 + $0x28] sm:$0xf]
    %v74 = vld [vmem:[#allocation5 + $0x2c] sm:$0xf]
    %v75 = vld [vmem:[#allocation5 + $0x30] sm:$0xf]
    %v76 = vld [vmem:[#allocation5 + $0x34] sm:$0xf]
    %v77 = vld [vmem:[#allocation5 + $0x38] sm:$0xf]
    %v78 = vld [vmem:[#allocation5 + $0x3c] sm:$0xf]
    %v95 = vunpack.c.l.b16 %v63
    %v96 = vunpack.c.l.b16 %v64
    %v97 = vunpack.c.l.b16 %v65
    %v98 = vunpack.c.l.b16 %v66
    %v99 = vunpack.c.l.b16 %v67
    %v100 = vunpack.c.l.b16 %v68
    %v101 = vunpack.c.l.b16 %v69
    %v102 = vunpack.c.l.b16 %v70
    %v103 = vunpack.c.l.b16 %v71
    %v104 = vunpack.c.l.b16 %v72
    %v105 = vunpack.c.l.b16 %v73
    %v106 = vunpack.c.l.b16 %v74
    %v107 = vunpack.c.l.b16 %v75
    %v108 = vunpack.c.l.b16 %v76
    %v109 = vunpack.c.l.b16 %v77
    %v110 = vunpack.c.l.b16 %v78
    %v111 = vpack.c.b16 %v96, %v95
    %v112 = vpack.c.b16 %v98, %v97
    %v113 = vpack.c.b16 %v100, %v99
    %v114 = vpack.c.b16 %v102, %v101
    %v115 = vpack.c.b16 %v104, %v103
    %v116 = vpack.c.b16 %v106, %v105
    %v117 = vpack.c.b16 %v108, %v107
    %v118 = vpack.c.b16 %v110, %v109
    %127 = vmatprep.subr.bf16.mxu0 0
    %128 = vmatpush1.bf16.msra.mxu0 %v111
    %129 = vmatprep.subr.bf16.mxu0 0
    %130 = vmatpush1.bf16.msra.mxu0 %v112
    %131 = vmatprep.subr.bf16.mxu0 0
    %132 = vmatpush1.bf16.msra.mxu0 %v113
    %133 = vmatprep.subr.bf16.mxu0 0
    %134 = vmatpush1.bf16.msra.mxu0 %v114
    %135 = vmatprep.subr.bf16.mxu0 0
    %136 = vmatpush1.bf16.msra.mxu0 %v115
    %137 = vmatprep.subr.bf16.mxu0 0
    %138 = vmatpush1.bf16.msra.mxu0 %v116
    %139 = vmatprep.subr.bf16.mxu0 0
    %140 = vmatpush1.bf16.msra.mxu0 %v117
    %141 = vmatprep.subr.bf16.mxu0 0
    %142 = vmatpush1.bf16.msra.mxu0 %v118
    %143 = vmatprep.subr.bf16.mxu0 0
    %144 = vmatpush1.bf16.msra.mxu0 0
    %145 = vmatprep.subr.bf16.mxu0 0
    %146 = vmatpush1.bf16.msra.mxu0 0
    %147 = vmatprep.subr.bf16.mxu0 0
    %148 = vmatpush1.bf16.msra.mxu0 0
    %149 = vmatprep.subr.bf16.mxu0 0
    %150 = vmatpush1.bf16.msra.mxu0 0
    %151 = vmatprep.subr.bf16.mxu0 0
    %152 = vmatpush1.bf16.msra.mxu0 0
    %153 = vmatprep.subr.bf16.mxu0 0
    %154 = vmatpush1.bf16.msra.mxu0 0
    %155 = vmatprep.subr.bf16.mxu0 0
    %156 = vmatpush1.bf16.msra.mxu0 0
    %157 = vmatprep.subr.bf16.mxu0 0
    %158 = vmatpush1.bf16.msra.mxu0 0
    %159 = vmatprep.mubr.bf16.mxu0 0
    %160 = vmatmul.mubr.bf16.gmra.mrb[0].mxu0 %v62
    %v161 = vpop.f32.mrb[0].mxu0
    %v162 = vadd.f32 0.0, %v161
    %v163 = vpop.f32.mrb[0].mxu0
    %v164 = vpop.f32.mrb[0].mxu0
    %v165 = vpop.f32.mrb[0].mxu0
    %166 = vdwg.mxu0
    %v167 = vadd.f32 %v61, %v162
    %168 = vst [vmem:[#allocation7] sm:$0xff] %v167
    // Predicated region
    $region26: #{tpu_custom_call.1} parent=1 // pred_check
      %p169 = pneg %p45
    $region27: #{tpu_custom_call.1} parent=1 // pred_check_branch
      %171 = sbr.rel (%p169) target = $region29
    $region28: #{tpu_custom_call.1} parent=1 // pred_region
      %v172 = vld [vmem:[#allocation7] sm:$0xff]
      %173 = vmax.xlane.f32.xlu0 %v172
      %v174 = vpop.xlane.xlu0 %173
      %175 = vst [vmem:[#allocation8] sm:$0xff] %v174
    $region29: #{tpu_custom_call.1} parent=1 // pred_fallthru
      _
    // Predicated region
    $region30: #{tpu_custom_call.1} parent=1 // pred_check
      _
    $region31: #{tpu_custom_call.1} parent=1 // pred_check_branch
      %177 = sbr.rel (0) target = $region33
    $region32: #{tpu_custom_call.1} parent=1 // pred_region
      %s179 = ssub.s32 128, 128
      %180 = vsyncadd [#allocation4], %s179
      %s182 = sshll.u32 [#allocation7], 4
      %s183 = int_to_ptr.vmem [resolvable:$true] %s182
      %185 = dma.vmem_to_hbm [thread:$0]  %s183, 128, %s3, [#allocation4]
    $region33: #{tpu_custom_call.1} parent=1 // pred_fallthru
      _
    // Predicated region
    $region34: #{tpu_custom_call.1} parent=1 // pred_check
      _
    $region35: #{tpu_custom_call.1} parent=1 // pred_check_branch
      %187 = sbr.rel (0) target = $region37
    $region36: #{tpu_custom_call.1} parent=1 // pred_region
      %s189 = ssub.s32 128, 128
      %190 = vsyncadd [#allocation9], %s189
      %s192 = sshll.u32 [#allocation8], 4
      %s193 = int_to_ptr.vmem [resolvable:$true] %s192
      %195 = dma.vmem_to_hbm [thread:$0]  %s193, 128, %s4, [#allocation9]
    $region37: #{tpu_custom_call.1} parent=1 // pred_fallthru
      _
    // Predicated region
    $region38: #{tpu_custom_call.1} parent=1 // pred_check
      _
    $region39: #{tpu_custom_call.1} parent=1 // pred_check_branch
      %197 = sbr.rel (0) target = $region41
    $region40: #{tpu_custom_call.1} parent=1 // pred_region
      %198 = dma.done [#allocation4], 128
    $region41: #{tpu_custom_call.1} parent=1 // pred_fallthru
      _
    // Predicated region
    $region42: #{tpu_custom_call.1} parent=1 // pred_check
      _
    $region43: #{tpu_custom_call.1} parent=1 // pred_check_branch
      %200 = sbr.rel (0) target = $region45
    $region44: #{tpu_custom_call.1} parent=1 // pred_region
      %201 = dma.done [#allocation9], 128
    $region45: #{tpu_custom_call.1} parent=1 // pred_fallthru
      _
    %202 = vsyncpa [#allocation3], 1
    %203 = vsyncpa [#allocation6], 1
    %204 = vsyncpa [#allocation4], 1
    %205 = vsyncpa [#allocation9], 1

</llo_original>
